<compile_context>
chip_gen: v6e
topology: v6e:2x2x1
jax: 0.10.0
libtpu: 0.0.40
codegen_flags: <defaults>
</compile_context>

<pallas_src>
import functools
import math

import jax
import jax.numpy as jnp
from jax.experimental import pallas as pl
from jax.experimental.pallas import tpu as pltpu

# ----- small, module-consistent hyperparameters ------------------------------
NUM_CLASSES = 24
IN_FEATURES = 128        # stand-in backbone channel width ("fc.in_features")
N_MELS      = 128        # module hardcodes 128 mel bins (bn0 = BatchNorm2d(128))
N_FFT       = 256        # scaled down from 2048 for a small runnable demo
HOP         = 64         # scaled down from 512
SR          = 32000
FMIN, FMAX  = 20.0, 16000.0
ENC_STRIDE  = 4          # stand-in encoder downsample (timm backbones use 32)
BATCH       = 2
SAMPLES     = 2048       # -> frames_num = SAMPLES // HOP + 1 = 33
BN_EPS      = 1e-5
AMIN        = 1e-10
LANE        = 128        # lane-padded width of fused att|cla|cla matmul/output


# =============================================================================
# Pallas kernel: post-encoder SED head (the hot path of TimmSED.forward)
# One grid step == one clip: x_ref is the (Tp, C) frequency-averaged feature
# block of that clip, out_ref is its packed (Tp, 128) result.
# =============================================================================
def sed_head_kernel(x_ref, fc1_wt_ref, fc1_b_ref, attcla_wt_ref, attcla_b_ref,
                    out_ref, *, nc):
    Tp, C = x_ref.shape
    NL = out_ref.shape[-1]                    # 128 (lane-padded class width)

    # Pooling in f32 (matches the PyTorch f32 path; cost is trivial per block).
    x = x_ref[...].astype(jnp.float32)        # (Tp, C)

    # F.max_pool1d(k=3,s=1,p=1) + F.avg_pool1d(k=3,s=1,p=1) over time.
    # Neighbor rows with the boundary value baked in: -inf pad for max pool,
    # 0 pad for avg pool (count_include_pad=True -> always divide by 3).
    neg_row = jnp.full((1, C), -jnp.inf, jnp.float32)
    zero_row = jnp.zeros((1, C), jnp.float32)
    prev_max = jnp.concatenate([neg_row, x[:-1, :]], axis=0)
    next_max = jnp.concatenate([x[1:, :], neg_row], axis=0)
    prev_avg = jnp.concatenate([zero_row, x[:-1, :]], axis=0)
    next_avg = jnp.concatenate([x[1:, :], zero_row], axis=0)

    x1 = jnp.maximum(jnp.maximum(prev_max, x), next_max)
    x2 = (prev_avg + x + next_avg) * (1.0 / 3.0)
    h = x1 + x2                               # dropout = identity in eval mode

    # fc1 + ReLU: (Tp, C) x (C, C) bf16 matmul, f32 accumulation.
    # TODO(synk): at real timm widths (C=1280-2048) add a K-split grid axis with
    # an f32 VMEM accumulator (+ pl.when init/finalize) to bound per-step VMEM.
    h = jnp.maximum(
        jnp.dot(h.astype(jnp.bfloat16), fc1_wt_ref[...],
                preferred_element_type=jnp.float32) + fc1_b_ref[...],
        0.0)

    # Fused att|cla|cla 1x1 convs: a single lane-padded (C, 128) matmul.
    # Lanes [0,nc)=att logits, [nc,2nc)=cla logits, [2nc,3nc)=cla logits (dup),
    # so the packed output needs no in-kernel lane shuffle.
    ac = jnp.dot(h.astype(jnp.bfloat16), attcla_wt_ref[...],
                 preferred_element_type=jnp.float32) + attcla_b_ref[...]  # (Tp, NL)

    # softmax(tanh(att)) over the time axis of this clip (axis 0).  The softmax
    # is per-lane, so the cla / zero-filler lanes are inert and sliced away in
    # the wrapper.
    att_t = jnp.tanh(ac)
    m = jnp.max(att_t, axis=0, keepdims=True)
    e = jnp.exp(att_t - m)
    norm_att = e / jnp.sum(e, axis=0, keepdims=True)

    cla = jax.nn.sigmoid(ac)                  # meaningful for lanes [nc, 2*nc)

    # Single lane-dense 128-wide store:
    #   lanes [0,nc)      = norm_att
    #   lanes [nc,2nc)    = sigmoid(cla)   (segmentwise_output)
    #   lanes [2nc,3nc)   = cla pre-act    (segmentwise_logit)
    lane = jax.lax.broadcasted_iota(jnp.int32, (Tp, NL), 1)
    out_ref[...] = jnp.where(lane < nc, norm_att,
                             jnp.where(lane < 2 * nc, cla, ac))


def sed_head(x_mean, head):
    """x_mean: (B, Tp, C) frequency-averaged encoder features (f32)."""
    B, Tp, C = x_mean.shape
    nc = NUM_CLASSES

    # Activations travel as bf16 (halves the input DMA); pooling/MXU accumulate
    # in f32 inside the kernel.
    x3d = x_mean.astype(jnp.bfloat16)

    grid_spec = pltpu.PrefetchScalarGridSpec(
        num_scalar_prefetch=0,
        grid=(B,),
        in_specs=[
            pl.BlockSpec((None, Tp, C), lambda b: (b, 0, 0)),     # per-clip block
            pl.BlockSpec((C, C), lambda b: (0, 0)),               # fc1 weight (resident)
            pl.BlockSpec((1, C), lambda b: (0, 0)),               # fc1 bias
            pl.BlockSpec((C, LANE), lambda b: (0, 0)),            # att|cla|cla weight
            pl.BlockSpec((1, LANE), lambda b: (0, 0)),            # att|cla|cla bias
        ],
        out_specs=pl.BlockSpec((None, Tp, LANE), lambda b: (b, 0, 0)),
    )
    kernel = functools.partial(sed_head_kernel, nc=nc)
    packed = pl.pallas_call(
        kernel,
        out_shape=jax.ShapeDtypeStruct((B, Tp, LANE), jnp.float32),
        grid_spec=grid_spec,
        compiler_params=pltpu.CompilerParams(
            # Clips are independent -> "parallel" shards grid steps across the
            # 2 TensorCores on v7x; also enables double-buffered pipelining.
            dimension_semantics=("parallel",),
            vmem_limit_bytes=32 * 1024 * 1024,
        ),
    )(x3d, head["fc1_wt"], head["fc1_b"], head["attcla_wt"], head["attcla_b"])

    norm_att = packed[:, :, :nc]                 # softmax(tanh(att)) over time
    segout = packed[:, :, nc:2 * nc]             # sigmoid(cla)
    seglogit = packed[:, :, 2 * nc:3 * nc]       # cla pre-activation
    clip = jnp.sum(norm_att * segout, axis=1)    # clipwise_output (B, nc)
    logit = jnp.sum(norm_att * seglogit, axis=1)  # logit          (B, nc)
    return clip, logit, segout, seglogit


# =============================================================================
# Plain-JAX glue: frozen front-end, stand-in encoder, framewise up-sampling
# =============================================================================
def hann_window(n):
    return 0.5 - 0.5 * jnp.cos(2.0 * jnp.pi * jnp.arange(n) / n)


def stft_power(wave, n_fft, hop, win):
    """center=True, reflect pad -> power spectrogram (B, T, n_fft//2+1)."""
    pad = n_fft // 2
    xp = jnp.pad(wave, ((0, 0), (pad, pad)), mode="reflect")
    n_frames = 1 + (xp.shape[1] - n_fft) // hop
    idx = jnp.arange(n_frames)[:, None] * hop + jnp.arange(n_fft)[None, :]
    frames = xp[:, idx] * win[None, None, :]                 # (B, T, n_fft)
    spec = jnp.fft.rfft(frames, n=n_fft, axis=-1)            # rfft, not dense DFT
    return spec.real ** 2 + spec.imag ** 2


def mel_filterbank(sr, n_fft, n_mels, fmin, fmax):
    """Slaney-scale, Slaney-normalized mel filterbank (librosa/torchlibrosa style)."""
    f_sp = 200.0 / 3.0
    min_log_hz = 1000.0
    min_log_mel = min_log_hz / f_sp
    logstep = math.log(6.4) / 27.0

    def hz_to_mel(f):
        f = jnp.asarray(f, jnp.float32)
        return jnp.where(
            f >= min_log_hz,
            min_log_mel + jnp.log(jnp.maximum(f, min_log_hz) / min_log_hz) / logstep,
            f / f_sp)

    def mel_to_hz(m):
        return jnp.where(
            m >= min_log_mel,
            min_log_hz * jnp.exp(logstep * (m - min_log_mel)),
            f_sp * m)

    mpts = jnp.linspace(hz_to_mel(fmin), hz_to_mel(fmax), n_mels + 2)
    fpts = mel_to_hz(mpts)
    bins = jnp.linspace(0.0, sr / 2.0, n_fft // 2 + 1)
    lower, center, upper = fpts[:-2], fpts[1:-1], fpts[2:]
    up = (bins[None, :] - lower[:, None]) / (center - lower)[:, None]
    down = (upper[:, None] - bins[None, :]) / (upper - center)[:, None]
    fb = jnp.maximum(0.0, jnp.minimum(up, down))             # (n_mels, bins)
    fb = fb * (2.0 / (upper - lower))[:, None]               # Slaney normalization
    return fb.T                                              # (bins, n_mels)


def encoder_standin(x, enc_w, enc_b):
    """x: (B, T, n_mels) log-mel after bn0.  Returns (B, Fp, Tp, C) features.

    TODO(synk): the timm backbone (arbitrary pretrained CNN) is replaced by a
    deterministic stand-in: stride-ENC_STRIDE average pooling over (freq, time)
    plus 1->C channel expansion + ReLU, emitted directly channels-last so no
    NCHW relayout transpose is needed.
    """
    B, T, Fm = x.shape
    Fp, Tp = Fm // ENC_STRIDE, T // ENC_STRIDE
    xr = x[:, :Tp * ENC_STRIDE, :Fp * ENC_STRIDE]
    xr = xr.reshape(B, Tp, ENC_STRIDE, Fp, ENC_STRIDE).mean(axis=(2, 4))  # (B,Tp,Fp)
    xr = jnp.transpose(xr, (0, 2, 1))                                     # (B,Fp,Tp)
    return jax.nn.relu(xr[..., None] * enc_w + enc_b)                     # (B,Fp,Tp,C)


def interpolate_time(x, ratio):
    """(B, T', nc) -> (B, T'*ratio, nc); each frame repeated `ratio` times."""
    return jnp.repeat(x, ratio, axis=1)


def pad_framewise(x, frames_num):
    """Bilinear (align_corners=True) resize along time to `frames_num` frames
    (matches F.interpolate in pad_framewise_output)."""
    B, Tin, nc = x.shape
    if Tin == 1 or frames_num == 1:
        return jnp.broadcast_to(x[:, :1, :], (B, frames_num, nc))
    pos = jnp.arange(frames_num) * (Tin - 1) / (frames_num - 1)
    lo = jnp.floor(pos).astype(jnp.int32)
    hi = jnp.minimum(lo + 1, Tin - 1)
    frac = (pos - lo)[None, :, None].astype(x.dtype)
    return x[:, lo, :] * (1.0 - frac) + x[:, hi, :] * frac


def timm_sed_forward(wave, params, head):
    win = hann_window(N_FFT)
    mel_fb = mel_filterbank(SR, N_FFT, N_MELS, FMIN, FMAX)

    # spectrogram_extractor + logmel_extractor (frozen)
    power = stft_power(wave.astype(jnp.float32), N_FFT, HOP, win)   # (B, T, bins)
    logmel = 10.0 * jnp.log10(jnp.maximum(power @ mel_fb, AMIN))    # (B, T, 128)
    frames_num = logmel.shape[1]

    # bn0 in eval mode with freshly-initialized stats: mean=0, var=1, g=1, b=0.
    # TODO(synk): a real checkpoint's running stats / affine params go here.
    x = logmel / jnp.sqrt(1.0 + BN_EPS)
    # spec_augmenter: training-only, skipped (eval mode)

    feat = encoder_standin(x, params["enc_w"], params["enc_b"])     # (B, Fp, Tp, C)
    # torch.mean(x, dim=2): frequency mean done in XLA so the Pallas kernel
    # only DMAs the reduced (B, Tp, C) tensor.
    x_mean = jnp.mean(feat, axis=1)                                 # (B, Tp, C)

    clip, logit, segout, seglogit = sed_head(x_mean, head)

    ratio = frames_num // segout.shape[1]
    fw_out = pad_framewise(interpolate_time(segout, ratio), frames_num)
    fw_logit = pad_framewise(interpolate_time(seglogit, ratio), frames_num)

    return {
        "framewise_output": fw_out,
        "segmentwise_output": segout,
        "logit": logit,
        "framewise_logit": fw_logit,
        "clipwise_output": clip,
    }


# =============================================================================
# Deterministic parameter initialization (mirrors init_layer / init_bn) and
# one-time packing of the head weights into kernel layout (hoisted out of the
# per-call path).
# =============================================================================
def make_params(key):
    k1, k2, k3, k4, k5 = jax.random.split(key, 5)
    C, nc = IN_FEATURES, NUM_CLASSES

    def xavier(k, shape, fan_in, fan_out):
        b = math.sqrt(6.0 / (fan_in + fan_out))
        return jax.random.uniform(k, shape, jnp.float32, -b, b)

    return {
        "fc1_w": xavier(k1, (C, C), C, C),
        "fc1_b": jnp.zeros((C,), jnp.float32),
        "att_w": xavier(k2, (nc, C, 1), C, nc),       # Conv1d(C, nc, 1) weight
        "att_b": jnp.zeros((nc,), jnp.float32),
        "cla_w": xavier(k3, (nc, C, 1), C, nc),
        "cla_b": jnp.zeros((nc,), jnp.float32),
        "enc_w": jax.random.uniform(k4, (C,), jnp.float32, -0.5, 0.5),
        "enc_b": jax.random.uniform(k5, (C,), jnp.float32, -0.1, 0.1),
    }


def pack_head_params(params):
    """Pack fc1 / att / cla weights into the kernel's fused, lane-padded layout.
    Done ONCE per checkpoint (not on the per-forward path)."""
    C, nc = IN_FEATURES, NUM_CLASSES
    fc1_wt = jnp.asarray(params["fc1_w"]).T.astype(jnp.bfloat16)           # (C, C)
    fc1_b = jnp.asarray(params["fc1_b"], jnp.float32).reshape(1, C)
    att_wt = jnp.asarray(params["att_w"], jnp.float32)[:, :, 0].T          # (C, nc)
    cla_wt = jnp.asarray(params["cla_w"], jnp.float32)[:, :, 0].T          # (C, nc)
    att_b = jnp.asarray(params["att_b"], jnp.float32)
    cla_b = jnp.asarray(params["cla_b"], jnp.float32)

    attcla_wt = jnp.zeros((C, LANE), jnp.float32)
    attcla_wt = (attcla_wt.at[:, :nc].set(att_wt)
                           .at[:, nc:2 * nc].set(cla_wt)
                           .at[:, 2 * nc:3 * nc].set(cla_wt))   # cla dup for pre-act
    attcla_b = jnp.zeros((1, LANE), jnp.float32)
    attcla_b = (attcla_b.at[0, :nc].set(att_b)
                         .at[0, nc:2 * nc].set(cla_b)
                         .at[0, 2 * nc:3 * nc].set(cla_b))

    return {
        "fc1_wt": fc1_wt,
        "fc1_b": fc1_b,
        "attcla_wt": attcla_wt.astype(jnp.bfloat16),
        "attcla_b": attcla_b,
    }


if __name__ == "__main__":
    key = jax.random.PRNGKey(0)
    kp, kx = jax.random.split(key)
    params = make_params(kp)
    head = pack_head_params(params)   # hoisted: packed once per checkpoint
    wave = 0.1 * jax.random.normal(kx, (BATCH, SAMPLES), jnp.float32)

    out = timm_sed_forward(wave, params, head)
    out = jax.block_until_ready(out)

    # light sanity checks on shapes/values
    assert out["clipwise_output"].shape == (BATCH, NUM_CLASSES)
    assert out["logit"].shape == (BATCH, NUM_CLASSES)
    assert out["segmentwise_output"].shape[0] == BATCH
    assert out["framewise_output"].shape == (BATCH, SAMPLES // HOP + 1, NUM_CLASSES)
    assert bool(jnp.all(jnp.isfinite(out["framewise_logit"])))
    assert bool(jnp.all(out["clipwise_output"] >= 0.0))
    assert bool(jnp.all(out["clipwise_output"] <= 1.0))
    print("KERNEL_OK")
</pallas_src>

<mosaic_0001>
module attributes {stable_mosaic.version = 11 : i64} {
  func.func @sed_head_kernel(%arg0: i32, %arg1: memref<1x8x128xbf16, #tpu.memory_space<vmem>>, %arg2: memref<128x128xbf16, #tpu.memory_space<vmem>>, %arg3: memref<1x128xf32, #tpu.memory_space<vmem>>, %arg4: memref<128x128xbf16, #tpu.memory_space<vmem>>, %arg5: memref<1x128xf32, #tpu.memory_space<vmem>>, %arg6: memref<1x8x128xf32, #tpu.memory_space<vmem>>) attributes {dimension_semantics = [#tpu.dimension_semantics<parallel>], iteration_bounds = array<i64: 2>, scalar_prefetch = 0 : i64, scratch_operands = 0 : i64, tpu.core_type = #tpu.core_type<tc>, window_params = [{transform_indices = @transform_0, window_bounds = array<i64: 1, 8, 128>}, {pipeline_mode = #tpu.pipeline_mode<synchronous>, transform_indices = @transform_1, window_bounds = array<i64: 128, 128>}, {pipeline_mode = #tpu.pipeline_mode<synchronous>, transform_indices = @transform_2, window_bounds = array<i64: 1, 128>}, {pipeline_mode = #tpu.pipeline_mode<synchronous>, transform_indices = @transform_3, window_bounds = array<i64: 128, 128>}, {pipeline_mode = #tpu.pipeline_mode<synchronous>, transform_indices = @transform_4, window_bounds = array<i64: 1, 128>}, {transform_indices = @transform_5, window_bounds = array<i64: 1, 8, 128>}]} {
    %c0 = arith.constant 0 : index
    %c0_0 = arith.constant 0 : index
    %c0_1 = arith.constant 0 : index
    %0 = vector.load %arg1[%c0, %c0_0, %c0_1] : memref<1x8x128xbf16, #tpu.memory_space<vmem>>, vector<1x8x128xbf16>
    %1 = vector.shape_cast %0 : vector<1x8x128xbf16> to vector<8x128xbf16>
    %2 = arith.extf %1 : vector<8x128xbf16> to vector<8x128xf32>
    %cst = arith.constant 0xFF800000 : f32
    %3 = vector.broadcast %cst : f32 to vector<1x128xf32>
    %cst_2 = arith.constant 0.000000e+00 : f32
    %4 = vector.broadcast %cst_2 : f32 to vector<1x128xf32>
    %5 = vector.extract_strided_slice %2 {offsets = [0, 0], sizes = [7, 128], strides = [1, 1]} : vector<8x128xf32> to vector<7x128xf32>
    %6 = tpu.concatenate %3, %5 in 0 : vector<1x128xf32>, vector<7x128xf32> -> vector<8x128xf32>
    %7 = vector.extract_strided_slice %2 {offsets = [1, 0], sizes = [7, 128], strides = [1, 1]} : vector<8x128xf32> to vector<7x128xf32>
    %8 = tpu.concatenate %7, %3 in 0 : vector<7x128xf32>, vector<1x128xf32> -> vector<8x128xf32>
    %9 = vector.extract_strided_slice %2 {offsets = [0, 0], sizes = [7, 128], strides = [1, 1]} : vector<8x128xf32> to vector<7x128xf32>
    %10 = tpu.concatenate %4, %9 in 0 : vector<1x128xf32>, vector<7x128xf32> -> vector<8x128xf32>
    %11 = vector.extract_strided_slice %2 {offsets = [1, 0], sizes = [7, 128], strides = [1, 1]} : vector<8x128xf32> to vector<7x128xf32>
    %12 = tpu.concatenate %11, %4 in 0 : vector<7x128xf32>, vector<1x128xf32> -> vector<8x128xf32>
    %13 = arith.maximumf %6, %2 : vector<8x128xf32>
    %14 = arith.maximumf %13, %8 : vector<8x128xf32>
    %15 = arith.addf %10, %2 : vector<8x128xf32>
    %16 = arith.addf %15, %12 : vector<8x128xf32>
    %cst_3 = arith.constant 0.333333343 : f32
    %17 = vector.broadcast %cst_3 : f32 to vector<8x128xf32>
    %18 = arith.mulf %16, %17 : vector<8x128xf32>
    %19 = arith.addf %14, %18 : vector<8x128xf32>
    %20 = arith.truncf %19 : vector<8x128xf32> to vector<8x128xbf16>
    %c0_4 = arith.constant 0 : index
    %c0_5 = arith.constant 0 : index
    %21 = vector.load %arg2[%c0_4, %c0_5] : memref<128x128xbf16, #tpu.memory_space<vmem>>, vector<128x128xbf16>
    %cst_6 = arith.constant dense<0.000000e+00> : vector<8x128xf32>
    %22 = tpu.matmul %20, %21, %cst_6 {dimension_numbers = #tpu.dot_dimension_numbers<[1], [0], [0], [1], [0, 0, 1, 1], [], []>} : vector<8x128xbf16>, vector<128x128xbf16>, vector<8x128xf32> -> vector<8x128xf32>
    %c0_7 = arith.constant 0 : index
    %c0_8 = arith.constant 0 : index
    %23 = vector.load %arg3[%c0_7, %c0_8] : memref<1x128xf32, #tpu.memory_space<vmem>>, vector<1x128xf32>
    %24 = vector.broadcast %23 : vector<1x128xf32> to vector<8x128xf32>
    %25 = arith.addf %22, %24 : vector<8x128xf32>
    %cst_9 = arith.constant 0.000000e+00 : f32
    %26 = vector.broadcast %cst_9 : f32 to vector<8x128xf32>
    %27 = arith.maximumf %25, %26 : vector<8x128xf32>
    %28 = arith.truncf %27 : vector<8x128xf32> to vector<8x128xbf16>
    %c0_10 = arith.constant 0 : index
    %c0_11 = arith.constant 0 : index
    %29 = vector.load %arg4[%c0_10, %c0_11] : memref<128x128xbf16, #tpu.memory_space<vmem>>, vector<128x128xbf16>
    %cst_12 = arith.constant dense<0.000000e+00> : vector<8x128xf32>
    %30 = tpu.matmul %28, %29, %cst_12 {dimension_numbers = #tpu.dot_dimension_numbers<[1], [0], [0], [1], [0, 0, 1, 1], [], []>} : vector<8x128xbf16>, vector<128x128xbf16>, vector<8x128xf32> -> vector<8x128xf32>
    %c0_13 = arith.constant 0 : index
    %c0_14 = arith.constant 0 : index
    %31 = vector.load %arg5[%c0_13, %c0_14] : memref<1x128xf32, #tpu.memory_space<vmem>>, vector<1x128xf32>
    %32 = vector.broadcast %31 : vector<1x128xf32> to vector<8x128xf32>
    %33 = arith.addf %30, %32 : vector<8x128xf32>
    %34 = math.tanh %33 : vector<8x128xf32>
    %cst_15 = arith.constant dense<0xFF800000> : vector<128xf32>
    %35 = vector.multi_reduction <maximumf>, %34, %cst_15 [0] : vector<8x128xf32> to vector<128xf32>
    %36 = vector.shape_cast %35 : vector<128xf32> to vector<1x128xf32>
    %37 = vector.broadcast %36 : vector<1x128xf32> to vector<8x128xf32>
    %38 = arith.subf %34, %37 : vector<8x128xf32>
    %39 = math.exp %38 : vector<8x128xf32>
    %cst_16 = arith.constant dense<0.000000e+00> : vector<128xf32>
    %40 = vector.multi_reduction <add>, %39, %cst_16 [0] : vector<8x128xf32> to vector<128xf32>
    %41 = vector.shape_cast %40 : vector<128xf32> to vector<1x128xf32>
    %42 = vector.broadcast %41 : vector<1x128xf32> to vector<8x128xf32>
    %43 = arith.divf %39, %42 : vector<8x128xf32>
    %44 = arith.negf %33 : vector<8x128xf32>
    %45 = math.exp %44 : vector<8x128xf32>
    %cst_17 = arith.constant 1.000000e+00 : f32
    %46 = vector.broadcast %cst_17 : f32 to vector<8x128xf32>
    %47 = arith.addf %46, %45 : vector<8x128xf32>
    %48 = arith.divf %46, %47 : vector<8x128xf32>
    %49 = tpu.iota {dimensions = array<i32: 1>} : vector<8x128xi32>
    %c24_i32 = arith.constant 24 : i32
    %50 = vector.broadcast %c24_i32 : i32 to vector<8x128xi32>
    %51 = arith.cmpi slt, %49, %50 : vector<8x128xi32>
    %c48_i32 = arith.constant 48 : i32
    %52 = vector.broadcast %c48_i32 : i32 to vector<8x128xi32>
    %53 = arith.cmpi slt, %49, %52 : vector<8x128xi32>
    %54 = arith.select %53, %48, %33 : vector<8x128xi1>, vector<8x128xf32>
    %55 = arith.select %51, %43, %54 : vector<8x128xi1>, vector<8x128xf32>
    %c0_18 = arith.constant 0 : index
    %c0_19 = arith.constant 0 : index
    %c0_20 = arith.constant 0 : index
    %56 = vector.load %arg6[%c0_18, %c0_19, %c0_20] : memref<1x8x128xf32, #tpu.memory_space<vmem>>, vector<1x8x128xf32>
    %57 = vector.shape_cast %56 : vector<1x8x128xf32> to vector<8x128xf32>
    %58 = vector.shape_cast %55 : vector<8x128xf32> to vector<1x8x128xf32>
    tpu.vector_store %arg6[%c0_18, %c0_19, %c0_20], %58 {strides = array<i32>} : memref<1x8x128xf32, #tpu.memory_space<vmem>>, vector<1x8x128xf32>,
    return
  }
  func.func @transform_0(%arg0: i32) -> (i32, i32, i32) {
    %c0_i32 = arith.constant 0 : i32
    %c0_i32_0 = arith.constant 0 : i32
    %c0_i32_1 = arith.constant 0 : i32
    return %arg0, %c0_i32, %c0_i32_0 : i32, i32, i32
  }
  func.func @transform_1(%arg0: i32) -> (i32, i32) {
    %c0_i32 = arith.constant 0 : i32
    %c0_i32_0 = arith.constant 0 : i32
    %c0_i32_1 = arith.constant 0 : i32
    return %c0_i32, %c0_i32_0 : i32, i32
  }
  func.func @transform_2(%arg0: i32) -> (i32, i32) {
    %c0_i32 = arith.constant 0 : i32
    %c0_i32_0 = arith.constant 0 : i32
    %c0_i32_1 = arith.constant 0 : i32
    return %c0_i32, %c0_i32_0 : i32, i32
  }
  func.func @transform_3(%arg0: i32) -> (i32, i32) {
    %c0_i32 = arith.constant 0 : i32
    %c0_i32_0 = arith.constant 0 : i32
    %c0_i32_1 = arith.constant 0 : i32
    return %c0_i32, %c0_i32_0 : i32, i32
  }
  func.func @transform_4(%arg0: i32) -> (i32, i32) {
    %c0_i32 = arith.constant 0 : i32
    %c0_i32_0 = arith.constant 0 : i32
    %c0_i32_1 = arith.constant 0 : i32
    return %c0_i32, %c0_i32_0 : i32, i32
  }
  func.func @transform_5(%arg0: i32) -> (i32, i32, i32) {
    %c0_i32 = arith.constant 0 : i32
    %c0_i32_0 = arith.constant 0 : i32
    %c0_i32_1 = arith.constant 0 : i32
    return %arg0, %c0_i32, %c0_i32_0 : i32, i32, i32
  }
}

</mosaic_0001>

<llo_original>
// kernel: tpu_custom_call.1
$region0: #{tpu_custom_call.1}
  #allocation0 [shape = 'u32[]', space=smem, size = 0x4, offset = 0x4, fixed_abs, tag = 'smem constant byte address 0x4 - core index']
  #allocation1 [shape = 'u32[144,128]{1,0:T(1,128)}', space=vmem, size = 0x12000, scoped, tag = 'internal scratch']
  %s0 = inlined_call_operand.hbm [shape: bf16[2,8,128], index: 0, kind: input, shape index: {}]
  %s1 = inlined_call_operand.hbm [shape: bf16[128,128], index: 1, kind: input, shape index: {}]
  %s2 = inlined_call_operand.vmem [shape: f32[1,128], index: 2, kind: input, shape index: {}]
  %s3 = inlined_call_operand.hbm [shape: bf16[128,128], index: 3, kind: input, shape index: {}]
  %s4 = inlined_call_operand.vmem [shape: f32[1,128], index: 4, kind: input, shape index: {}]
  %s5 = inlined_call_operand.hbm [shape: f32[2,8,128], index: 5, kind: output, shape index: {}]
  %s6 = sld [smem:[#allocation0]]
  $region65: #{tpu_custom_call.1} parent=0
    _
  %s8 = ssub.s32 1, %s6
  %s9 = scalar_select 0, %s8, %s6
  $region1: #{tpu_custom_call.1} parent=0
    #allocation2 [shape = 'u8[4096]{0}', space=vmem, size = 0x1000, scoped, tag = 'input window, operand 0']
    #allocation3 [shape = 's32[2]{0}', space=sflag, size = 0x8, scoped, tag = 'scoped memory for tpu_custom_call.1']
    #allocation4 [shape = 's32[2]{0}', space=sflag, size = 0x8, scoped, tag = 'scoped memory for tpu_custom_call.1']
    #allocation5 [shape = 'u8[32768]{0}', space=vmem, size = 0x8000, scoped, tag = 'input window, operand 1, single buffered']
    #allocation6 [shape = 's32[1]{0}', space=sflag, size = 0x4, scoped, tag = 'scoped memory for tpu_custom_call.1']
    #allocation7 [shape = 'u8[32768]{0}', space=vmem, size = 0x8000, scoped, tag = 'input window, operand 3, single buffered']
    #allocation8 [shape = 'u8[8192]{0}', space=vmem, size = 0x2000, scoped, tag = 'output window, operand 0']
    %10 = vsyncpa [#allocation3], 0
    %s11 = scalar_lea.sflag [#allocation3], 1
    %12 = vsyncpa %s11, 0
    %13 = vsyncpa [#allocation6], 0
    %14 = vsyncpa [#allocation4], 0
    %s15 = scalar_lea.sflag [#allocation4], 1
    %16 = vsyncpa %s15, 0
    loop: start=0, step=1, limit=4
    $region2: #{tpu_custom_call.1} parent=1 // loop_pre_header
      _
    $region3: #{tpu_custom_call.1} parent=1 // loop_header
      %s18 = sphi 0, %s22
      %p19 = scmp.ge.s32.totalorder %s18, 4
      %s28 = sphi 0, %s30
      %s31 = sphi 0, %s28
      %s32 = sphi 0, %s31
      %s48 = sphi 0, %s32
      %s52 = sphi 0, %s52
      %s54 = sphi 0, %s52
      %s55 = sphi 0, %s54
      %s69 = sphi 0, %s55
      %s73 = sphi 0, %s73
      %s75 = sphi 0, %s73
      %s76 = sphi 0, %s75
      %s90 = sphi 0, %s76
      %s94 = sphi 0, %s94
      %s96 = sphi 0, %s94
      %s97 = sphi 0, %s96
      %s111 = sphi 0, %s97
      %s115 = sphi 0, %s115
      %s117 = sphi 0, %s115
      %s118 = sphi 0, %s117
      %s132 = sphi 0, %s118
      %s138 = sphi 0, %s140
      %s141 = sphi 0, %s138
      %s142 = sphi 0, %s141
      %s158 = sphi 0, %s142
    $region4: #{tpu_custom_call.1} parent=1 // loop_header_branch
      %21 = sbr.rel (%p19) target = $region8
    $region5: #{tpu_custom_call.1} parent=1 // loop_body
      %s23 = ssub.s32 %s18, 1
      %s24 = ssub.s32 %s18, 2
      %s25 = sadd.s32 %s18, 1
      %s26 = ssub.s32 %s18, %s25
      %p27 = scmp.eq.s32.totalorder %s26, 0
      %s29 = sadd.s32 %s28, 1
      %s30 = scalar_select %p27, %s28, %s29
      %p33 = pneg %p27
      %p34 = scmp.eq.s32.totalorder %s18, 1
      %p35 = por %p33, %p34
      %p36 = scmp.ne.s32.totalorder %s28, %s31
      %p37 = scmp.eq.s32.totalorder %s18, 0
      %p38 = por %p36, %p37
      %p39 = scmp.ne.s32.totalorder %s28, %s31
      %p40 = scmp.eq.s32.totalorder %s23, 1
      %p41 = por %p39, %p40
      %p42 = scmp.ne.s32.totalorder %s31, %s32
      %p43 = scmp.eq.s32.totalorder %s23, 0
      %p44 = por %p42, %p43
      %p45 = scmp.ne.s32.totalorder %s31, %s32
      %p46 = scmp.eq.s32.totalorder %s24, 1
      %p47 = por %p45, %p46
      %p49 = scmp.ne.s32.totalorder %s32, %s48
      %p50 = scmp.eq.s32.totalorder %s24, 0
      %p51 = por %p49, %p50
      %s53 = sadd.s32 %s52, 1
      %p56 = scmp.eq.s32.totalorder %s18, 1
      %p57 = scmp.ne.s32.totalorder %s52, %s54
      %p58 = scmp.eq.s32.totalorder %s18, 0
      %p59 = por %p57, %p58
      %p60 = scmp.ne.s32.totalorder %s52, %s54
      %p61 = scmp.eq.s32.totalorder %s23, 1
      %p62 = por %p60, %p61
      %p63 = scmp.ne.s32.totalorder %s54, %s55
      %p64 = scmp.eq.s32.totalorder %s23, 0
      %p65 = por %p63, %p64
      %p66 = scmp.ne.s32.totalorder %s54, %s55
      %p67 = scmp.eq.s32.totalorder %s24, 1
      %p68 = por %p66, %p67
      %p70 = scmp.ne.s32.totalorder %s55, %s69
      %p71 = scmp.eq.s32.totalorder %s24, 0
      %p72 = por %p70, %p71
      %s74 = sadd.s32 %s73, 1
      %p77 = scmp.eq.s32.totalorder %s18, 1
      %p78 = scmp.ne.s32.totalorder %s73, %s75
      %p79 = scmp.eq.s32.totalorder %s18, 0
      %p80 = por %p78, %p79
      %p81 = scmp.ne.s32.totalorder %s73, %s75
      %p82 = scmp.eq.s32.totalorder %s23, 1
      %p83 = por %p81, %p82
      %p84 = scmp.ne.s32.totalorder %s75, %s76
      %p85 = scmp.eq.s32.totalorder %s23, 0
      %p86 = por %p84, %p85
      %p87 = scmp.ne.s32.totalorder %s75, %s76
      %p88 = scmp.eq.s32.totalorder %s24, 1
      %p89 = por %p87, %p88
      %p91 = scmp.ne.s32.totalorder %s76, %s90
      %p92 = scmp.eq.s32.totalorder %s24, 0
      %p93 = por %p91, %p92
      %s95 = sadd.s32 %s94, 1
      %p98 = scmp.eq.s32.totalorder %s18, 1
      %p99 = scmp.ne.s32.totalorder %s94, %s96
      %p100 = scmp.eq.s32.totalorder %s18, 0
      %p101 = por %p99, %p100
      %p102 = scmp.ne.s32.totalorder %s94, %s96
      %p103 = scmp.eq.s32.totalorder %s23, 1
      %p104 = por %p102, %p103
      %p105 = scmp.ne.s32.totalorder %s96, %s97
      %p106 = scmp.eq.s32.totalorder %s23, 0
      %p107 = por %p105, %p106
      %p108 = scmp.ne.s32.totalorder %s96, %s97
      %p109 = scmp.eq.s32.totalorder %s24, 1
      %p110 = por %p108, %p109
      %p112 = scmp.ne.s32.totalorder %s97, %s111
      %p113 = scmp.eq.s32.totalorder %s24, 0
      %p114 = por %p112, %p113
      %s116 = sadd.s32 %s115, 1
      %p119 = scmp.eq.s32.totalorder %s18, 1
      %p120 = scmp.ne.s32.totalorder %s115, %s117
      %p121 = scmp.eq.s32.totalorder %s18, 0
      %p122 = por %p120, %p121
      %p123 = scmp.ne.s32.totalorder %s115, %s117
      %p124 = scmp.eq.s32.totalorder %s23, 1
      %p125 = por %p123, %p124
      %p126 = scmp.ne.s32.totalorder %s117, %s118
      %p127 = scmp.eq.s32.totalorder %s23, 0
      %p128 = por %p126, %p127
      %p129 = scmp.ne.s32.totalorder %s117, %s118
      %p130 = scmp.eq.s32.totalorder %s24, 1
      %p131 = por %p129, %p130
      %p133 = scmp.ne.s32.totalorder %s118, %s132
      %p134 = scmp.eq.s32.totalorder %s24, 0
      %p135 = por %p133, %p134
      %s136 = ssub.s32 %s18, %s25
      %p137 = scmp.eq.s32.totalorder %s136, 0
      %s139 = sadd.s32 %s138, 1
      %s140 = scalar_select %p137, %s138, %s139
      %p143 = pneg %p137
      %p144 = scmp.eq.s32.totalorder %s18, 1
      %p145 = por %p143, %p144
      %p146 = scmp.ne.s32.totalorder %s138, %s141
      %p147 = scmp.eq.s32.totalorder %s18, 0
      %p148 = por %p146, %p147
      %p149 = scmp.ne.s32.totalorder %s138, %s141
      %p150 = scmp.eq.s32.totalorder %s23, 1
      %p151 = por %p149, %p150
      %p152 = scmp.ne.s32.totalorder %s141, %s142
      %p153 = scmp.eq.s32.totalorder %s23, 0
      %p154 = por %p152, %p153
      %p155 = scmp.ne.s32.totalorder %s141, %s142
      %p156 = scmp.eq.s32.totalorder %s24, 1
      %p157 = por %p155, %p156
      %p159 = scmp.ne.s32.totalorder %s142, %s158
      %p160 = scmp.eq.s32.totalorder %s24, 0
      %p161 = por %p159, %p160
      %p162 = scmp.le.s32.totalorder 1, %s18
      %p163 = scmp.lt.s32.totalorder %s18, 3
      %p164 = pnand %p162, %p163
      %p165 = pneg %p164
      // Predicated region
      $region9: #{tpu_custom_call.1} parent=5 // pred_check
        _
      $region10: #{tpu_custom_call.1} parent=5 // pred_check_branch
        %167 = sbr.rel (%p164) target = $region12
      $region11: #{tpu_custom_call.1} parent=5 // pred_region
        %s168 = ssub.s32 %s18, 1
        // Predicated region
        $region13: #{tpu_custom_call.1} parent=11 // pred_check
          %p169 = pneg %p65
        $region14: #{tpu_custom_call.1} parent=11 // pred_check_branch
          %171 = sbr.rel (%p169) target = $region16
        $region15: #{tpu_custom_call.1} parent=11 // pred_region
          %s173 = ssub.s32 1024, 1024
          %174 = vsyncadd [#allocation6], %s173
          %s175 = sshll.u32 [#allocation5], 4
          %s176 = int_to_ptr.vmem [resolvable:$true] %s175
          %181 = dma.hbm_to_vmem [thread:$0]  %s1, 1024, %s176, [#allocation6], 64, 64, 4
        $region16: #{tpu_custom_call.1} parent=11 // pred_fallthru
          _
        // Predicated region
        $region17: #{tpu_custom_call.1} parent=11 // pred_check
          %p182 = pneg %p86
        $region18: #{tpu_custom_call.1} parent=11 // pred_check_branch
          %184 = sbr.rel (%p182) target = $region20
        $region19: #{tpu_custom_call.1} parent=11 // pred_region
          _
        $region20: #{tpu_custom_call.1} parent=11 // pred_fallthru
          _
        // Predicated region
        $region21: #{tpu_custom_call.1} parent=11 // pred_check
          %p185 = pneg %p107
        $region22: #{tpu_custom_call.1} parent=11 // pred_check_branch
          %187 = sbr.rel (%p185) target = $region24
        $region23: #{tpu_custom_call.1} parent=11 // pred_region
          %s189 = ssub.s32 1024, 1024
          %190 = vsyncadd [#allocation6], %s189
          %s191 = sshll.u32 [#allocation7], 4
          %s192 = int_to_ptr.vmem [resolvable:$true] %s191
          %197 = dma.hbm_to_vmem [thread:$0]  %s3, 1024, %s192, [#allocation6], 64, 64, 4
        $region24: #{tpu_custom_call.1} parent=11 // pred_fallthru
          _
        // Predicated region
        $region25: #{tpu_custom_call.1} parent=11 // pred_check
          %p198 = pneg %p128
        $region26: #{tpu_custom_call.1} parent=11 // pred_check_branch
          %200 = sbr.rel (%p198) target = $region28
        $region27: #{tpu_custom_call.1} parent=11 // pred_region
          _
        $region28: #{tpu_custom_call.1} parent=11 // pred_fallthru
          _
      $region12: #{tpu_custom_call.1} parent=5 // pred_fallthru
        _
      %p201 = scmp.lt.s32.totalorder %s18, 2
      // Predicated region
      $region29: #{tpu_custom_call.1} parent=5 // pred_check
        %p202 = pneg %p201
      $region30: #{tpu_custom_call.1} parent=5 // pred_check_branch
        %204 = sbr.rel (%p202) target = $region32
      $region31: #{tpu_custom_call.1} parent=5 // pred_region
        // Predicated region
        $region33: #{tpu_custom_call.1} parent=31 // pred_check
          %p205 = pneg %p38
        $region34: #{tpu_custom_call.1} parent=31 // pred_check_branch
          %207 = sbr.rel (%p205) target = $region36
        $region35: #{tpu_custom_call.1} parent=31 // pred_region
          %s208 = sand.u32 %s28, 1
          %s209 = scalar_lea.sflag [#allocation3], %s208
          %s210 = sand.u32 %s28, 1
          %s211 = smul.addr %s210, 4
          %s212 = scalar_lea.vmem [#allocation2], %s211
          %s214 = ssub.s32 64, 64
          %215 = vsyncadd %s209, %s214
          %s216 = smul.addr %s18, 64
          %s217 = scalar_lea.hbm %s0, %s216
          %s219 = sshll.u32 %s212, 4
          %s220 = int_to_ptr.vmem [resolvable:$true] %s219
          %222 = dma.hbm_to_vmem [thread:$0]  %s217, 64, %s220, %s209
        $region36: #{tpu_custom_call.1} parent=31 // pred_fallthru
          _
      $region32: #{tpu_custom_call.1} parent=5 // pred_fallthru
        _
      %p223 = scmp.le.s32.totalorder 1, %s18
      %p224 = scmp.lt.s32.totalorder %s18, 3
      %p225 = pnand %p223, %p224
      %p226 = pneg %p225
      // Predicated region
      $region37: #{tpu_custom_call.1} parent=5 // pred_check
        _
      $region38: #{tpu_custom_call.1} parent=5 // pred_check_branch
        %228 = sbr.rel (%p225) target = $region40
      $region39: #{tpu_custom_call.1} parent=5 // pred_region
        %s229 = ssub.s32 %s18, 1
        %s230 = sand.u32 %s31, 1
        %s231 = scalar_lea.sflag [#allocation3], %s230
        %s232 = sand.u32 %s31, 1
        %s233 = smul.addr %s232, 4
        %s234 = scalar_lea.vmem [#allocation2], %s233
        // Predicated region
        $region41: #{tpu_custom_call.1} parent=39 // pred_check
          %p235 = pneg %p44
        $region42: #{tpu_custom_call.1} parent=39 // pred_check_branch
          %237 = sbr.rel (%p235) target = $region44
        $region43: #{tpu_custom_call.1} parent=39 // pred_region
          %238 = dma.done %s231, 64
        $region44: #{tpu_custom_call.1} parent=39 // pred_fallthru
          _
        // Predicated region
        $region45: #{tpu_custom_call.1} parent=39 // pred_check
          %p239 = pneg %p65
        $region46: #{tpu_custom_call.1} parent=39 // pred_check_branch
          %241 = sbr.rel (%p239) target = $region48
        $region47: #{tpu_custom_call.1} parent=39 // pred_region
          %242 = dma.done [#allocation6], 1024
        $region48: #{tpu_custom_call.1} parent=39 // pred_fallthru
          _
        // Predicated region
        $region49: #{tpu_custom_call.1} parent=39 // pred_check
          %p243 = pneg %p107
        $region50: #{tpu_custom_call.1} parent=39 // pred_check_branch
          %245 = sbr.rel (%p243) target = $region52
        $region51: #{tpu_custom_call.1} parent=39 // pred_region
          %246 = dma.done [#allocation6], 1024
        $region52: #{tpu_custom_call.1} parent=39 // pred_fallthru
          _
        %s247 = sand.u32 %s31, 1
        %s248 = scalar_lea.sflag [#allocation3], %s247
        %s249 = sand.u32 %s31, 1
        %s250 = smul.addr %s249, 4
        %s251 = scalar_lea.vmem [#allocation2], %s250
        %p252 = pneg %p44
        %p253 = pneg %p41
        %p254 = pneg %p65
        %p255 = pneg %p62
        %p256 = pneg %p86
        %p257 = pneg %p83
        %p258 = pneg %p107
        %p259 = pneg %p104
        %p260 = pneg %p128
        %p261 = pneg %p125
        %p262 = pneg %p154
        %p263 = pneg %p151
        %s264 = sand.u32 %s141, 1
        %s265 = scalar_lea.sflag [#allocation4], %s264
        %s266 = sand.u32 %s141, 1
        %s267 = smul.addr %s266, 8
        %s268 = scalar_lea.vmem [#allocation8], %s267
        %v270 = vld [vmem:[%s234] sm:$0xf]
        %v271 = vunpack.c.l.bf16 %v270
        %v273 = vrot.slane %v271, 7
        %vm275 = vcmask 1040384
        %v276 = vsel %vm275, -inf, %v273
        %v277 = vrot.slane %v271, 1
        %vm279 = vcmask 1046528
        %v280 = vsel %vm279, %v277, -inf
        %v281 = vsel %vm275, 0.0, %v273
        %v282 = vsel %vm279, %v277, 0.0
        %v283 = vmax.f32 %v276, %v271
        %v284 = vmax.f32 %v283, %v280
        %v285 = vadd.f32 %v281, %v271
        %v286 = vadd.f32 %v285, %v282
        %v287 = vmul.f32 %v286, 0.33333334
        %v288 = vadd.f32 %v284, %v287
        %v289 = vpack.c.bf16 %v288, %v288
        %v290 = vld [vmem:[#allocation5] sm:$0xf]
        %v291 = vld [vmem:[#allocation5 + $0x4] sm:$0xf]
        %v292 = vld [vmem:[#allocation5 + $0x8] sm:$0xf]
        %v293 = vld [vmem:[#allocation5 + $0xc] sm:$0xf]
        %v294 = vld [vmem:[#allocation5 + $0x10] sm:$0xf]
        %v295 = vld [vmem:[#allocation5 + $0x14] sm:$0xf]
        %v296 = vld [vmem:[#allocation5 + $0x18] sm:$0xf]
        %v297 = vld [vmem:[#allocation5 + $0x1c] sm:$0xf]
        %v298 = vld [vmem:[#allocation5 + $0x20] sm:$0xf]
        %v299 = vld [vmem:[#allocation5 + $0x24] sm:$0xf]
        %v300 = vld [vmem:[#allocation5 + $0x28] sm:$0xf]
        %v301 = vld [vmem:[#allocation5 + $0x2c] sm:$0xf]
        %v302 = vld [vmem:[#allocation5 + $0x30] sm:$0xf]
        %v303 = vld [vmem:[#allocation5 + $0x34] sm:$0xf]
        %v304 = vld [vmem:[#allocation5 + $0x38] sm:$0xf]
        %v305 = vld [vmem:[#allocation5 + $0x3c] sm:$0xf]
        %v306 = vld [vmem:[%s2] sm:$0x1]
        %v308 = vlaneseq
        %v309 = vshrl.u32 %v308, 7
        %v310 = vsub.s32 0, %v309
        %v311 = vrot.slane %v306, %v310
        %v329 = vunpack.c.l.b16 %v290
        %v330 = vunpack.c.l.b16 %v291
        %v331 = vunpack.c.l.b16 %v292
        %v332 = vunpack.c.l.b16 %v293
        %v333 = vunpack.c.l.b16 %v294
        %v334 = vunpack.c.l.b16 %v295
        %v335 = vunpack.c.l.b16 %v296
        %v336 = vunpack.c.l.b16 %v297
        %v337 = vunpack.c.l.b16 %v298
        %v338 = vunpack.c.l.b16 %v299
        %v339 = vunpack.c.l.b16 %v300
        %v340 = vunpack.c.l.b16 %v301
        %v341 = vunpack.c.l.b16 %v302
        %v342 = vunpack.c.l.b16 %v303
        %v343 = vunpack.c.l.b16 %v304
        %v344 = vunpack.c.l.b16 %v305
        %v345 = vpack.c.b16 %v330, %v329
        %v346 = vpack.c.b16 %v332, %v331
        %v347 = vpack.c.b16 %v334, %v333
        %v348 = vpack.c.b16 %v336, %v335
        %v349 = vpack.c.b16 %v338, %v337
        %v350 = vpack.c.b16 %v340, %v339
        %v351 = vpack.c.b16 %v342, %v341
        %v352 = vpack.c.b16 %v344, %v343
        %361 = vmatprep.subr.bf16.mxu0 0
        %362 = vmatpush1.bf16.msra.mxu0 %v352
        %363 = vmatprep.subr.bf16.mxu0 0
        %364 = vmatpush1.bf16.msra.mxu0 %v351
        %365 = vmatprep.subr.bf16.mxu0 0
        %366 = vmatpush1.bf16.msra.mxu0 %v350
        %367 = vmatprep.subr.bf16.mxu0 0
        %368 = vmatpush1.bf16.msra.mxu0 %v349
        %369 = vmatprep.subr.bf16.mxu0 0
        %370 = vmatpush1.bf16.msra.mxu0 %v348
        %371 = vmatprep.subr.bf16.mxu0 0
        %372 = vmatpush1.bf16.msra.mxu0 %v347
        %373 = vmatprep.subr.bf16.mxu0 0
        %374 = vmatpush1.bf16.msra.mxu0 %v346
        %375 = vmatprep.subr.bf16.mxu0 0
        %376 = vmatpush1.bf16.msra.mxu0 %v345
        %377 = vmatprep.subr.bf16.mxu0 0
        %378 = vmatpush2.bf16.msra.mxu0 0
        %379 = vmatprep.subr.bf16.mxu0 0
        %380 = vmatpush2.bf16.msra.mxu0 0
        %381 = vmatprep.subr.bf16.mxu0 0
        %382 = vmatpush2.bf16.msra.mxu0 0
        %383 = vmatprep.subr.bf16.mxu0 0
        %384 = vmatpush2.bf16.msra.mxu0 0
        %385 = vmatprep.subr.bf16.mxu0 0
        %386 = vmatpush2.bf16.msra.mxu0 0
        %387 = vmatprep.subr.bf16.mxu0 0
        %388 = vmatpush2.bf16.msra.mxu0 0
        %389 = vmatprep.subr.bf16.mxu0 0
        %390 = vmatpush2.bf16.msra.mxu0 0
        %391 = vmatprep.subr.bf16.mxu0 0
        %392 = vmatpush2.bf16.msra.mxu0 0
        %393 = vmatprep.mubr.bf16.mxu0 0
        %394 = vmatmul.mubr.bf16.gmra.mxu0 %v289
        %v395 = vpop.f32.mrf.mxu0
        %v396 = vadd.f32 %v311, %v395
        %v397 = vpop.f32.mrf.mxu0
        %v398 = vpop.f32.mrf.mxu0
        %v399 = vpop.f32.mrf.mxu0
        %400 = vdwg.mxu0
        %v401 = vmax.f32 %v396, 0.0
        %v402 = vpack.c.bf16 %v401, %v401
        %v403 = vld [vmem:[#allocation7] sm:$0xf]
        %v404 = vld [vmem:[#allocation7 + $0x4] sm:$0xf]
        %v405 = vld [vmem:[#allocation7 + $0x8] sm:$0xf]
        %v406 = vld [vmem:[#allocation7 + $0xc] sm:$0xf]
        %v407 = vld [vmem:[#allocation7 + $0x10] sm:$0xf]
        %v408 = vld [vmem:[#allocation7 + $0x14] sm:$0xf]
        %v409 = vld [vmem:[#allocation7 + $0x18] sm:$0xf]
        %v410 = vld [vmem:[#allocation7 + $0x1c] sm:$0xf]
        %v411 = vld [vmem:[#allocation7 + $0x20] sm:$0xf]
        %v412 = vld [vmem:[#allocation7 + $0x24] sm:$0xf]
        %v413 = vld [vmem:[#allocation7 + $0x28] sm:$0xf]
        %v414 = vld [vmem:[#allocation7 + $0x2c] sm:$0xf]
        %v415 = vld [vmem:[#allocation7 + $0x30] sm:$0xf]
        %v416 = vld [vmem:[#allocation7 + $0x34] sm:$0xf]
        %v417 = vld [vmem:[#allocation7 + $0x38] sm:$0xf]
        %v418 = vld [vmem:[#allocation7 + $0x3c] sm:$0xf]
        %v419 = vld [vmem:[%s4] sm:$0x1]
        %v421 = vlaneseq
        %v422 = vshrl.u32 %v421, 7
        %v423 = vsub.s32 0, %v422
        %v424 = vrot.slane %v419, %v423
        %v442 = vunpack.c.l.b16 %v403
        %v443 = vunpack.c.l.b16 %v404
        %v444 = vunpack.c.l.b16 %v405
        %v445 = vunpack.c.l.b16 %v406
        %v446 = vunpack.c.l.b16 %v407
        %v447 = vunpack.c.l.b16 %v408
        %v448 = vunpack.c.l.b16 %v409
        %v449 = vunpack.c.l.b16 %v410
        %v450 = vunpack.c.l.b16 %v411
        %v451 = vunpack.c.l.b16 %v412
        %v452 = vunpack.c.l.b16 %v413
        %v453 = vunpack.c.l.b16 %v414
        %v454 = vunpack.c.l.b16 %v415
        %v455 = vunpack.c.l.b16 %v416
        %v456 = vunpack.c.l.b16 %v417
        %v457 = vunpack.c.l.b16 %v418
        %v458 = vpack.c.b16 %v443, %v442
        %v459 = vpack.c.b16 %v445, %v444
        %v460 = vpack.c.b16 %v447, %v446
        %v461 = vpack.c.b16 %v449, %v448
        %v462 = vpack.c.b16 %v451, %v450
        %v463 = vpack.c.b16 %v453, %v452
        %v464 = vpack.c.b16 %v455, %v454
        %v465 = vpack.c.b16 %v457, %v456
        %474 = vmatprep.subr.bf16.mxu0 0
        %475 = vmatpush1.bf16.msra.mxu0 %v465
        %476 = vmatprep.subr.bf16.mxu0 0
        %477 = vmatpush1.bf16.msra.mxu0 %v464
        %478 = vmatprep.subr.bf16.mxu0 0
        %479 = vmatpush1.bf16.msra.mxu0 %v463
        %480 = vmatprep.subr.bf16.mxu0 0
        %481 = vmatpush1.bf16.msra.mxu0 %v462
        %482 = vmatprep.subr.bf16.mxu0 0
        %483 = vmatpush1.bf16.msra.mxu0 %v461
        %484 = vmatprep.subr.bf16.mxu0 0
        %485 = vmatpush1.bf16.msra.mxu0 %v460
        %486 = vmatprep.subr.bf16.mxu0 0
        %487 = vmatpush1.bf16.msra.mxu0 %v459
        %488 = vmatprep.subr.bf16.mxu0 0
        %489 = vmatpush1.bf16.msra.mxu0 %v458
        %490 = vmatprep.subr.bf16.mxu0 0
        %491 = vmatpush2.bf16.msra.mxu0 0
        %492 = vmatprep.subr.bf16.mxu0 0
        %493 = vmatpush2.bf16.msra.mxu0 0
        %494 = vmatprep.subr.bf16.mxu0 0
        %495 = vmatpush2.bf16.msra.mxu0 0
        %496 = vmatprep.subr.bf16.mxu0 0
        %497 = vmatpush2.bf16.msra.mxu0 0
        %498 = vmatprep.subr.bf16.mxu0 0
        %499 = vmatpush2.bf16.msra.mxu0 0
        %500 = vmatprep.subr.bf16.mxu0 0
        %501 = vmatpush2.bf16.msra.mxu0 0
        %502 = vmatprep.subr.bf16.mxu0 0
        %503 = vmatpush2.bf16.msra.mxu0 0
        %504 = vmatprep.subr.bf16.mxu0 0
        %505 = vmatpush2.bf16.msra.mxu0 0
        %506 = vmatprep.mubr.bf16.mxu0 0
        %507 = vmatmul.mubr.bf16.gmra.mxu0 %v402
        %v508 = vpop.f32.mrf.mxu0
        %v509 = vadd.f32 %v424, %v508
        %v510 = vpop.f32.mrf.mxu0
        %v511 = vpop.f32.mrf.mxu0
        %v512 = vpop.f32.mrf.mxu0
        %513 = vdwg.mxu0
        %v514 = vtanh.pop %v509
        %v515 = vrot.slane %v514, 4
        %v516 = vmax.f32 %v514, %v515
        %v517 = vrot.slane %v516, 2
        %v518 = vmax.f32 %v516, %v517
        %v519 = vrot.slane %v518, 1
        %v520 = vmax.f32 %v518, %v519
        %v521 = vsub.f32 %v514, %v520
        %v522 = vmul.f32 %v521, 1.442695
        %v523 = vpow.pop %v522
        %v524 = vrot.slane %v523, 4
        %v525 = vadd.f32 %v523, %v524
        %v526 = vrot.slane %v525, 2
        %v527 = vadd.f32 %v525, %v526
        %v528 = vrot.slane %v527, 1
        %v529 = vadd.f32 %v527, %v528
        %v530 = vrcp.pop %v529
        %v531 = vmul.f32 %v523, %v530
        %v532 = vxor.u32 %v509, 2147483648
        %v533 = vmul.f32 %v532, 1.442695
        %v534 = vpow.pop %v533
        %v535 = vadd.f32 %v534, 1.0
        %v536 = vrcp.pop %v535
        %v537 = vmul.f32 1.0, %v536
        %v538 = vlaneseq
        %v539 = vand.u32 %v538, 127
        %vm540 = vcmp.lt.s32.totalorder %v539, 24
        %vm541 = vcmp.lt.s32.totalorder %v539, 48
        %v542 = vsel %vm541, %v537, %v509
        %v543 = vsel %vm540, %v531, %v542
        %544 = vst [vmem:[%s268] sm:$0xff] %v543
        %s545 = sand.u32 %s141, 1
        %s546 = scalar_lea.sflag [#allocation4], %s545
        %s547 = sand.u32 %s141, 1
        %s548 = smul.addr %s547, 8
        %s549 = scalar_lea.vmem [#allocation8], %s548
        // Predicated region
        $region53: #{tpu_custom_call.1} parent=39 // pred_check
          %p550 = pneg %p151
        $region54: #{tpu_custom_call.1} parent=39 // pred_check_branch
          %552 = sbr.rel (%p550) target = $region56
        $region55: #{tpu_custom_call.1} parent=39 // pred_region
          %s554 = ssub.s32 128, 128
          %555 = vsyncadd %s546, %s554
          %s556 = smul.addr %s23, 128
          %s557 = scalar_lea.hbm %s5, %s556
          %s559 = sshll.u32 %s549, 4
          %s560 = int_to_ptr.vmem [resolvable:$true] %s559
          %562 = dma.vmem_to_hbm [thread:$0]  %s560, 128, %s557, %s546
        $region56: #{tpu_custom_call.1} parent=39 // pred_fallthru
          _
      $region40: #{tpu_custom_call.1} parent=5 // pred_fallthru
        _
      %p563 = scmp.le.s32.totalorder 2, %s18
      // Predicated region
      $region57: #{tpu_custom_call.1} parent=5 // pred_check
        %p564 = pneg %p563
      $region58: #{tpu_custom_call.1} parent=5 // pred_check_branch
        %566 = sbr.rel (%p564) target = $region60
      $region59: #{tpu_custom_call.1} parent=5 // pred_region
        %s567 = ssub.s32 %s18, 2
        // Predicated region
        $region61: #{tpu_custom_call.1} parent=59 // pred_check
          %p568 = pneg %p157
        $region62: #{tpu_custom_call.1} parent=59 // pred_check_branch
          %570 = sbr.rel (%p568) target = $region64
        $region63: #{tpu_custom_call.1} parent=59 // pred_region
          %s571 = sand.u32 %s142, 1
          %s572 = scalar_lea.sflag [#allocation4], %s571
          %s573 = sand.u32 %s142, 1
          %s574 = smul.addr %s573, 8
          %s575 = scalar_lea.vmem [#allocation8], %s574
          %576 = dma.done %s572, 128
        $region64: #{tpu_custom_call.1} parent=59 // pred_fallthru
          _
      $region60: #{tpu_custom_call.1} parent=5 // pred_fallthru
        _
    $region6: #{tpu_custom_call.1} parent=1 // loop_footer
      %s22 = sadd.s32 1, %s18
    $region7: #{tpu_custom_call.1} parent=1 // loop_footer_branch
      %17 = sbr.rel target = $region3
    $region8: #{tpu_custom_call.1} parent=1 // loop_exit
      _
    %577 = vsyncpa [#allocation3], 1
    %s578 = scalar_lea.sflag [#allocation3], 1
    %579 = vsyncpa %s578, 1
    %580 = vsyncpa [#allocation6], 1
    %581 = vsyncpa [#allocation4], 1
    %s582 = scalar_lea.sflag [#allocation4], 1
    %583 = vsyncpa %s582, 1

</llo_original>
